<compile_context>
chip_gen: v6e
topology: v6e:2x2x1
jax: 0.10.0
libtpu: 0.0.40
codegen_flags: <defaults>
</compile_context>

<pallas_src>
import jax
import jax.numpy as jnp
from jax.experimental import pallas as pl
from jax.experimental.pallas import tpu as pltpu

_NEG_BIG = -1e30  # finite "minus infinity" for the length mask
# NOTE: rows with memory_lengths[b] == 0 yield a uniform 1/S distribution here
# instead of the NaN the -inf PyTorch path produces (intentional divergence).


def _global_attn_kernel(len_ref, src_ref, mem_ref, w_ref, out_h_ref, out_a_ref):
    """One query tile (all batches) of 'dot' global attention.

    len_ref   : VMEM int32 [B, 1, 1]  memory lengths
    src_ref   : VMEM       [B, tT, D] query tile (matmul dtype)
    mem_ref   : VMEM       [B, S, D]  memory bank, grid-resident (matmul dtype)
    w_ref     : VMEM       [2D, D]    linear_out.weight^T, grid-resident
    out_h_ref : VMEM f32   [tT, B, D] time-major (PyTorch return layout)
    out_a_ref : VMEM f32   [tT, B, S] time-major
    """
    d = w_ref.shape[1]
    s = src_ref[...]                      # (B, tT, D)
    m = mem_ref[...]                      # (B, S, D)

    # scores[b,t,j] = <source[b,t], memory_bank[b,j]>  (no bank transpose).
    scores = jax.lax.dot_general(
        s, m, dimension_numbers=(((2,), (2,)), ((0,), (0,))),
        preferred_element_type=jnp.float32)          # (B, tT, S) f32

    # sequence mask: positions j >= memory_lengths[b] -> large finite negative.
    col = jax.lax.broadcasted_iota(jnp.int32, scores.shape, dimension=2)
    scores = jnp.where(col < len_ref[...], scores, _NEG_BIG)

    # softmax over src_len in f32, exact reciprocal (align rows sum to 1).
    mx = jnp.max(scores, axis=-1, keepdims=True)
    p = jnp.exp(scores - mx)
    attn = p / jnp.sum(p, axis=-1, keepdims=True)    # (B, tT, S) f32

    # context c = attn @ memory_bank
    c = jax.lax.dot_general(
        attn.astype(m.dtype), m,
        dimension_numbers=(((2,), (1,)), ((0,), (0,))),
        preferred_element_type=jnp.float32)          # (B, tT, D) f32

    # linear_out([c, source]) without the concat temporary:
    #   h = c @ W^T[:D] + source @ W^T[D:]
    h = jax.lax.dot_general(
        c.astype(w_ref.dtype), w_ref[:d, :],
        dimension_numbers=(((2,), (0,)), ((), ())),
        preferred_element_type=jnp.float32)
    h = h + jax.lax.dot_general(
        s, w_ref[d:, :],
        dimension_numbers=(((2,), (0,)), ((), ())),
        preferred_element_type=jnp.float32)

    # VMEM-local (B, tT) -> (tT, B) swap: emits PyTorch's [T, B, ...] layout
    # directly and removes the wrapper-side HBM transpose pass.
    out_h_ref[...] = jnp.transpose(jnp.tanh(h), (1, 0, 2)).astype(out_h_ref.dtype)
    out_a_ref[...] = jnp.transpose(attn, (1, 0, 2)).astype(out_a_ref.dtype)


def _default_vmem_budget():
    """~3/4 of physical VMEM: ≈96 MiB on v5e/v6e, ≈48 MiB on v7x."""
    try:
        cap = int(pltpu.get_tpu_info().vmem_capacity_bytes)
    except Exception:
        cap = 64 * 1024 * 1024
    return (cap * 3) // 4


def _pick_block_t(T, B, S, D, in_bytes, budget_bytes):
    """Largest 128-multiple query tile whose per-step VMEM estimate fits.

    Floor of 128 (review: never collapse the MXU M dimension to 8-64 rows);
    a T shorter than 128 is processed in one tile.
    """
    if T <= 128:
        return T
    resident = in_bytes * (2 * B * S * D + 2 * 2 * D * D) + 4 * B
    for bt in (1024, 512, 256, 128):
        if bt > T:
            continue
        per_step = (resident
                    + 2 * in_bytes * B * bt * D        # source tile (dbl-buffered)
                    + 2 * 4 * bt * B * D               # attn_h tile (dbl-buffered)
                    + 2 * 4 * bt * B * S               # align tile (dbl-buffered)
                    + 4 * B * bt * (3 * S + 2 * D))    # f32 temporaries
        if per_step <= budget_bytes:
            return bt
    return 128


def global_attention_dot(source, memory_bank, memory_lengths=None, w_out=None, *,
                         matmul_dtype=jnp.bfloat16, block_t=None,
                         vmem_limit_bytes=None):
    """
    source         : f32 [B, T, D] (or [B, D] for one-step)
    memory_bank    : f32 [B, S, D]
    memory_lengths : int32 [B] or None
    w_out          : f32 [D, 2*D]  (torch nn.Linear(dim*2, dim, bias=False).weight)

    Returns (attn_h [T, B, D], align_vectors [T, B, S]) — PyTorch convention
    (or [B, D], [B, S] for one-step input).
    """
    one_step = source.ndim == 2
    if one_step:
        source = source[:, None, :]

    B, T, D = source.shape
    _, S, _ = memory_bank.shape

    if memory_lengths is None:
        memory_lengths = jnp.full((B,), S, dtype=jnp.int32)
    lengths = memory_lengths.astype(jnp.int32).reshape(B, 1, 1)

    if vmem_limit_bytes is None:
        vmem_limit_bytes = _default_vmem_budget()

    in_bytes = jnp.dtype(matmul_dtype).itemsize
    if block_t is None:
        block_t = _pick_block_t(T, B, S, D, in_bytes, vmem_limit_bytes)
    block_t = max(1, min(int(block_t), T))
    if block_t < T:
        block_t = min(T, ((block_t + 7) // 8) * 8)     # keep sublane-aligned
    num_t = pl.cdiv(T, block_t)
    t_pad = num_t * block_t

    src = source.astype(matmul_dtype)
    if t_pad != T:
        src = jnp.pad(src, ((0, 0), (0, t_pad - T), (0, 0)))
    mem = memory_bank.astype(matmul_dtype)
    w_t = jnp.transpose(w_out).astype(matmul_dtype)    # (2D, D); [:D]=c half, [D:]=source half

    grid_spec = pltpu.PrefetchScalarGridSpec(
        num_scalar_prefetch=0,
        grid=(num_t,),
        in_specs=[
            pl.BlockSpec((B, 1, 1), lambda t: (0, 0, 0)),         # lengths (resident)
            pl.BlockSpec((B, block_t, D), lambda t: (0, t, 0)),   # source tile
            pl.BlockSpec((B, S, D), lambda t: (0, 0, 0)),         # memory bank (resident)
            pl.BlockSpec((2 * D, D), lambda t: (0, 0)),           # W^T (resident)
        ],
        out_specs=[
            pl.BlockSpec((block_t, B, D), lambda t: (t, 0, 0)),   # attn_h, time-major
            pl.BlockSpec((block_t, B, S), lambda t: (t, 0, 0)),   # align,  time-major
        ],
    )

    flops = (2 * B * t_pad * S * D       # scores
             + 2 * B * t_pad * S * D     # context
             + 2 * B * t_pad * 2 * D * D)  # output projection
    transcendentals = B * t_pad * (S + D + 1)
    bytes_accessed = (in_bytes * (B * t_pad * D + B * S * D + 2 * D * D)
                      + 4 * (B * t_pad * D + B * t_pad * S) + 4 * B)

    attn_h, align = pl.pallas_call(
        _global_attn_kernel,
        out_shape=(
            jax.ShapeDtypeStruct((t_pad, B, D), jnp.float32),
            jax.ShapeDtypeStruct((t_pad, B, S), jnp.float32),
        ),
        grid_spec=grid_spec,
        compiler_params=pltpu.CompilerParams(
            dimension_semantics=("parallel",),
            vmem_limit_bytes=vmem_limit_bytes),
        cost_estimate=pl.CostEstimate(
            flops=flops, transcendentals=transcendentals,
            bytes_accessed=bytes_accessed),
    )(lengths, src, mem, w_t)

    if t_pad != T:
        attn_h = attn_h[:T]
        align = align[:T]
    if one_step:
        attn_h = attn_h[0]
        align = align[0]
    return attn_h, align


def _reference(source, memory_bank, memory_lengths, w_out, matmul_dtype=jnp.float32):
    """Pure-JAX reference matching the PyTorch forward (attn_type='dot'),
    with the same cast points as the kernel when matmul_dtype != f32."""
    hp = jax.lax.Precision.HIGHEST
    dt = matmul_dtype
    D = source.shape[-1]
    S = memory_bank.shape[1]
    s = source.astype(dt)
    m = memory_bank.astype(dt)
    w = w_out.astype(dt)
    scores = jnp.einsum("btd,bsd->bts", s, m, precision=hp,
                        preferred_element_type=jnp.float32)
    mask = (jnp.arange(S)[None, :] < memory_lengths[:, None])[:, None, :]
    scores = jnp.where(mask, scores, -jnp.inf)
    av = jax.nn.softmax(scores, axis=-1)
    c = jnp.einsum("bts,bsd->btd", av.astype(dt), m, precision=hp,
                   preferred_element_type=jnp.float32)
    h = (jnp.einsum("btd,ed->bte", c.astype(dt), w[:, :D], precision=hp,
                    preferred_element_type=jnp.float32)
         + jnp.einsum("btd,ed->bte", s, w[:, D:], precision=hp,
                      preferred_element_type=jnp.float32))
    attn_h = jnp.tanh(h)
    return jnp.transpose(attn_h, (1, 0, 2)), jnp.transpose(av, (1, 0, 2))


if __name__ == "__main__":
    B, T, S, D = 2, 8, 8, 32

    key = jax.random.PRNGKey(0)
    k1, k2, k3 = jax.random.split(key, 3)

    source = jax.random.normal(k1, (B, T, D), dtype=jnp.float32)
    memory_bank = jax.random.normal(k2, (B, S, D), dtype=jnp.float32)
    memory_lengths = jnp.array([S, S - 3], dtype=jnp.int32)

    # linear_out: nn.Linear(dim*2, dim, bias=False) -> weight shape (D, 2D)
    limit = (6.0 / (D + 2 * D)) ** 0.5
    w_out = jax.random.uniform(k3, (D, 2 * D), dtype=jnp.float32,
                               minval=-limit, maxval=limit)

    # --- f32 MXU path: tight parity with the PyTorch forward ---
    h32, a32 = global_attention_dot(source, memory_bank, memory_lengths, w_out,
                                    matmul_dtype=jnp.float32)
    jax.block_until_ready((h32, a32))
    ref_h, ref_a = _reference(source, memory_bank, memory_lengths, w_out)
    assert h32.shape == (T, B, D) and a32.shape == (T, B, S)
    assert jnp.allclose(h32, ref_h, atol=2e-3, rtol=2e-3), "attn_h mismatch (f32)"
    assert jnp.allclose(a32, ref_a, atol=2e-3, rtol=2e-3), "align mismatch (f32)"

    # --- bf16 MXU path (default): compare against a same-precision reference ---
    h16, a16 = global_attention_dot(source, memory_bank, memory_lengths, w_out)
    jax.block_until_ready((h16, a16))
    ref_h16, ref_a16 = _reference(source, memory_bank, memory_lengths, w_out,
                                  matmul_dtype=jnp.bfloat16)
    assert jnp.allclose(h16, ref_h16, atol=2e-2, rtol=2e-2), "attn_h mismatch (bf16)"
    assert jnp.allclose(a16, ref_a16, atol=2e-2, rtol=2e-2), "align mismatch (bf16)"

    print("KERNEL_OK")
</pallas_src>

<mosaic_0001>
module attributes {stable_mosaic.version = 11 : i64} {
  func.func @_global_attn_kernel(%arg0: i32, %arg1: memref<2x1x1xi32, #tpu.memory_space<vmem>>, %arg2: memref<2x8x32xf32, #tpu.memory_space<vmem>>, %arg3: memref<2x8x32xf32, #tpu.memory_space<vmem>>, %arg4: memref<64x32xf32, #tpu.memory_space<vmem>>, %arg5: memref<8x2x32xf32, #tpu.memory_space<vmem>>, %arg6: memref<8x2x8xf32, #tpu.memory_space<vmem>>) attributes {dimension_semantics = [#tpu.dimension_semantics<parallel>], iteration_bounds = array<i64: 1>, scalar_prefetch = 0 : i64, scratch_operands = 0 : i64, tpu.core_type = #tpu.core_type<tc>, window_params = [{pipeline_mode = #tpu.pipeline_mode<synchronous>, transform_indices = @transform_0, window_bounds = array<i64: 2, 1, 1>}, {transform_indices = @transform_1, window_bounds = array<i64: 2, 8, 32>}, {pipeline_mode = #tpu.pipeline_mode<synchronous>, transform_indices = @transform_2, window_bounds = array<i64: 2, 8, 32>}, {pipeline_mode = #tpu.pipeline_mode<synchronous>, transform_indices = @transform_3, window_bounds = array<i64: 64, 32>}, {transform_indices = @transform_4, window_bounds = array<i64: 8, 2, 32>}, {transform_indices = @transform_5, window_bounds = array<i64: 8, 2, 8>}]} {
    %c0 = arith.constant 0 : index
    %c0_0 = arith.constant 0 : index
    %c0_1 = arith.constant 0 : index
    %0 = vector.load %arg2[%c0, %c0_0, %c0_1] : memref<2x8x32xf32, #tpu.memory_space<vmem>>, vector<2x8x32xf32>
    %c0_2 = arith.constant 0 : index
    %c0_3 = arith.constant 0 : index
    %c0_4 = arith.constant 0 : index
    %1 = vector.load %arg3[%c0_2, %c0_3, %c0_4] : memref<2x8x32xf32, #tpu.memory_space<vmem>>, vector<2x8x32xf32>
    %cst = arith.constant dense<0.000000e+00> : vector<2x8x8xf32>
    %2 = tpu.matmul %0, %1, %cst {dimension_numbers = #tpu.dot_dimension_numbers<[2], [2], [1], [1], [0, 0, 0, 1, 1, 1], [0], [0]>} : vector<2x8x32xf32>, vector<2x8x32xf32>, vector<2x8x8xf32> -> vector<2x8x8xf32>
    %3 = tpu.iota {dimensions = array<i32: 2>} : vector<2x8x8xi32>
    %c0_5 = arith.constant 0 : index
    %c0_6 = arith.constant 0 : index
    %c0_7 = arith.constant 0 : index
    %4 = vector.load %arg1[%c0_5, %c0_6, %c0_7] : memref<2x1x1xi32, #tpu.memory_space<vmem>>, vector<2x1x1xi32>
    %5 = vector.broadcast %4 : vector<2x1x1xi32> to vector<2x8x8xi32>
    %6 = arith.cmpi slt, %3, %5 : vector<2x8x8xi32>
    %cst_8 = arith.constant -1.000000e+30 : f32
    %7 = vector.broadcast %cst_8 : f32 to vector<2x8x8xf32>
    %8 = arith.select %6, %2, %7 : vector<2x8x8xi1>, vector<2x8x8xf32>
    %cst_9 = arith.constant dense<0xFF800000> : vector<2x8xf32>
    %9 = vector.multi_reduction <maximumf>, %8, %cst_9 [2] : vector<2x8x8xf32> to vector<2x8xf32>
    %10 = vector.shape_cast %9 : vector<2x8xf32> to vector<2x8x1xf32>
    %11 = vector.broadcast %10 : vector<2x8x1xf32> to vector<2x8x8xf32>
    %12 = arith.subf %8, %11 : vector<2x8x8xf32>
    %13 = math.exp %12 : vector<2x8x8xf32>
    %cst_10 = arith.constant dense<0.000000e+00> : vector<2x8xf32>
    %14 = vector.multi_reduction <add>, %13, %cst_10 [2] : vector<2x8x8xf32> to vector<2x8xf32>
    %15 = vector.shape_cast %14 : vector<2x8xf32> to vector<2x8x1xf32>
    %16 = vector.broadcast %15 : vector<2x8x1xf32> to vector<2x8x8xf32>
    %17 = arith.divf %13, %16 : vector<2x8x8xf32>
    %cst_11 = arith.constant dense<0.000000e+00> : vector<2x8x32xf32>
    %18 = tpu.matmul %17, %1, %cst_11 {dimension_numbers = #tpu.dot_dimension_numbers<[2], [1], [1], [2], [0, 0, 0, 1, 1, 2], [0], [0]>} : vector<2x8x8xf32>, vector<2x8x32xf32>, vector<2x8x32xf32> -> vector<2x8x32xf32>
    %c0_12 = arith.constant 0 : index
    %c0_13 = arith.constant 0 : index
    %19 = vector.load %arg4[%c0_12, %c0_13] : memref<64x32xf32, #tpu.memory_space<vmem>>, vector<32x32xf32>
    %cst_14 = arith.constant dense<0.000000e+00> : vector<2x8x32xf32>
    %20 = tpu.matmul %18, %19, %cst_14 {dimension_numbers = #tpu.dot_dimension_numbers<[2], [0], [0, 1], [1], [0, 0, 0, 1, 1, 1], [], []>} : vector<2x8x32xf32>, vector<32x32xf32>, vector<2x8x32xf32> -> vector<2x8x32xf32>
    %c32 = arith.constant 32 : index
    %c0_15 = arith.constant 0 : index
    %21 = vector.load %arg4[%c32, %c0_15] : memref<64x32xf32, #tpu.memory_space<vmem>>, vector<32x32xf32>
    %cst_16 = arith.constant dense<0.000000e+00> : vector<2x8x32xf32>
    %22 = tpu.matmul %0, %21, %cst_16 {dimension_numbers = #tpu.dot_dimension_numbers<[2], [0], [0, 1], [1], [0, 0, 0, 1, 1, 1], [], []>} : vector<2x8x32xf32>, vector<32x32xf32>, vector<2x8x32xf32> -> vector<2x8x32xf32>
    %23 = arith.addf %20, %22 : vector<2x8x32xf32>
    %24 = math.tanh %23 : vector<2x8x32xf32>
    %25 = tpu.transpose %24, [1, 0, 2] : vector<2x8x32xf32> -> vector<8x2x32xf32>
    %c0_17 = arith.constant 0 : index
    %c0_18 = arith.constant 0 : index
    %c0_19 = arith.constant 0 : index
    %26 = vector.load %arg5[%c0_17, %c0_18, %c0_19] : memref<8x2x32xf32, #tpu.memory_space<vmem>>, vector<8x2x32xf32>
    tpu.vector_store %arg5[%c0_17, %c0_18, %c0_19], %25 {strides = array<i32>} : memref<8x2x32xf32, #tpu.memory_space<vmem>>, vector<8x2x32xf32>,
    %27 = tpu.transpose %17, [1, 0, 2] : vector<2x8x8xf32> -> vector<8x2x8xf32>
    %c0_20 = arith.constant 0 : index
    %c0_21 = arith.constant 0 : index
    %c0_22 = arith.constant 0 : index
    %28 = vector.load %arg6[%c0_20, %c0_21, %c0_22] : memref<8x2x8xf32, #tpu.memory_space<vmem>>, vector<8x2x8xf32>
    tpu.vector_store %arg6[%c0_20, %c0_21, %c0_22], %27 {strides = array<i32>} : memref<8x2x8xf32, #tpu.memory_space<vmem>>, vector<8x2x8xf32>,
    return
  }
  func.func @transform_0(%arg0: i32) -> (i32, i32, i32) {
    %c0_i32 = arith.constant 0 : i32
    %c0_i32_0 = arith.constant 0 : i32
    %c0_i32_1 = arith.constant 0 : i32
    %c0_i32_2 = arith.constant 0 : i32
    return %c0_i32, %c0_i32_0, %c0_i32_1 : i32, i32, i32
  }
  func.func @transform_1(%arg0: i32) -> (i32, i32, i32) {
    %c0_i32 = arith.constant 0 : i32
    %c0_i32_0 = arith.constant 0 : i32
    %c0_i32_1 = arith.constant 0 : i32
    return %c0_i32, %arg0, %c0_i32_0 : i32, i32, i32
  }
  func.func @transform_2(%arg0: i32) -> (i32, i32, i32) {
    %c0_i32 = arith.constant 0 : i32
    %c0_i32_0 = arith.constant 0 : i32
    %c0_i32_1 = arith.constant 0 : i32
    %c0_i32_2 = arith.constant 0 : i32
    return %c0_i32, %c0_i32_0, %c0_i32_1 : i32, i32, i32
  }
  func.func @transform_3(%arg0: i32) -> (i32, i32) {
    %c0_i32 = arith.constant 0 : i32
    %c0_i32_0 = arith.constant 0 : i32
    %c0_i32_1 = arith.constant 0 : i32
    return %c0_i32, %c0_i32_0 : i32, i32
  }
  func.func @transform_4(%arg0: i32) -> (i32, i32, i32) {
    %c0_i32 = arith.constant 0 : i32
    %c0_i32_0 = arith.constant 0 : i32
    %c0_i32_1 = arith.constant 0 : i32
    return %arg0, %c0_i32, %c0_i32_0 : i32, i32, i32
  }
  func.func @transform_5(%arg0: i32) -> (i32, i32, i32) {
    %c0_i32 = arith.constant 0 : i32
    %c0_i32_0 = arith.constant 0 : i32
    %c0_i32_1 = arith.constant 0 : i32
    return %arg0, %c0_i32, %c0_i32_0 : i32, i32, i32
  }
}

</mosaic_0001>

<llo_original>
// kernel: tpu_custom_call.1
$region0: #{tpu_custom_call.1}
  #allocation0 [shape = 'u32[]', space=smem, size = 0x4, offset = 0x4, fixed_abs, tag = 'smem constant byte address 0x4 - core index']
  #allocation1 [shape = 'u32[144,128]{1,0:T(1,128)}', space=vmem, size = 0x12000, scoped, tag = 'internal scratch']
  %s0 = inlined_call_operand.vmem [shape: s32[2,1,1], index: 0, kind: input, shape index: {}]
  %s1 = inlined_call_operand.vmem [shape: f32[2,8,32], index: 1, kind: input, shape index: {}]
  %s2 = inlined_call_operand.vmem [shape: f32[2,8,32], index: 2, kind: input, shape index: {}]
  %s3 = inlined_call_operand.vmem [shape: f32[64,32], index: 3, kind: input, shape index: {}]
  %s4 = inlined_call_operand.hbm [shape: f32[8,2,32], index: 4, kind: output, shape index: {0}]
  %s5 = inlined_call_operand.hbm [shape: f32[8,2,8], index: 5, kind: output, shape index: {1}]
  %6 = xla_tuple %s4, %s5
  %s7 = sld [smem:[#allocation0]]
  $region34: #{tpu_custom_call.1} parent=0
    _
  %s9 = ssub.s32 1, %s7
  %s10 = scalar_select 0, %s9, %s7
  $region1: #{tpu_custom_call.1} parent=0
    #allocation2 [shape = 'u8[8192]{0}', space=vmem, size = 0x2000, scoped, tag = 'output window, operand 0, single buffered']
    #allocation3 [shape = 's32[1]{0}', space=sflag, size = 0x4, scoped, tag = 'scoped memory for tpu_custom_call.1']
    #allocation4 [shape = 'u8[8192]{0}', space=vmem, size = 0x2000, scoped, tag = 'output window, operand 1, single buffered']
    #allocation5 [shape = 's32[1]{0}', space=sflag, size = 0x4, scoped, tag = 'scoped memory for tpu_custom_call.1']
    %11 = vsyncpa [#allocation3], 0
    %12 = vsyncpa [#allocation5], 0
    // Predicated region
    $region2: #{tpu_custom_call.1} parent=1 // pred_check
      _
    $region3: #{tpu_custom_call.1} parent=1 // pred_check_branch
      %14 = sbr.rel (0) target = $region5
    $region4: #{tpu_custom_call.1} parent=1 // pred_region
      _
    $region5: #{tpu_custom_call.1} parent=1 // pred_fallthru
      _
    // Predicated region
    $region6: #{tpu_custom_call.1} parent=1 // pred_check
      _
    $region7: #{tpu_custom_call.1} parent=1 // pred_check_branch
      %16 = sbr.rel (0) target = $region9
    $region8: #{tpu_custom_call.1} parent=1 // pred_region
      _
    $region9: #{tpu_custom_call.1} parent=1 // pred_fallthru
      _
    // Predicated region
    $region10: #{tpu_custom_call.1} parent=1 // pred_check
      _
    $region11: #{tpu_custom_call.1} parent=1 // pred_check_branch
      %18 = sbr.rel (0) target = $region13
    $region12: #{tpu_custom_call.1} parent=1 // pred_region
      _
    $region13: #{tpu_custom_call.1} parent=1 // pred_fallthru
      _
    // Predicated region
    $region14: #{tpu_custom_call.1} parent=1 // pred_check
      _
    $region15: #{tpu_custom_call.1} parent=1 // pred_check_branch
      %20 = sbr.rel (0) target = $region17
    $region16: #{tpu_custom_call.1} parent=1 // pred_region
      _
    $region17: #{tpu_custom_call.1} parent=1 // pred_fallthru
      _
    %v21 = vld [vmem:[%s1] sm:$0xff]
    %v22 = vld [vmem:[%s1 + $0x8] sm:$0xff]
    %v23 = vld [vmem:[%s2] sm:$0xff]
    %v24 = vld [vmem:[%s2 + $0x8] sm:$0xff]
    %vm25 = vcmask 261120
    %v27 = vsel %vm25, %v21, 0
    %v30 = vsel %vm25, %v23, 0
    %32 = vmatprep.subr.mxu0 0.0
    %33 = vmatpush1.xpose.msra.mxu0 0.0
    %34 = vmatprep.subr.mxu0 0.0
    %35 = vmatpush1.xpose.msra.mxu0 0.0
    %36 = vmatprep.subr.mxu0 0.0
    %37 = vmatpush1.xpose.msra.mxu0 0.0
    %38 = vmatprep.subr.mxu0 0.0
    %39 = vmatpush1.xpose.msra.mxu0 0.0
    %40 = vmatprep.subr.mxu0 0.0
    %41 = vmatpush1.xpose.msra.mxu0 0.0
    %42 = vmatprep.subr.mxu0 0.0
    %43 = vmatpush1.xpose.msra.mxu0 0.0
    %44 = vmatprep.subr.mxu0 0.0
    %45 = vmatpush1.xpose.msra.mxu0 0.0
    %46 = vmatprep.subr.mxu0 0.0
    %47 = vmatpush1.xpose.msra.mxu0 0.0
    %48 = vmatprep.subr.mxu0 0.0
    %49 = vmatpush1.xpose.msra.mxu0 0.0
    %50 = vmatprep.subr.mxu0 0.0
    %51 = vmatpush1.xpose.msra.mxu0 0.0
    %52 = vmatprep.subr.mxu0 0.0
    %53 = vmatpush1.xpose.msra.mxu0 0.0
    %54 = vmatprep.subr.mxu0 0.0
    %55 = vmatpush1.xpose.msra.mxu0 0.0
    %56 = vmatprep.subr.mxu0 0.0
    %57 = vmatpush1.xpose.msra.mxu0 0.0
    %58 = vmatprep.subr.mxu0 0.0
    %59 = vmatpush1.xpose.msra.mxu0 0.0
    %60 = vmatprep.subr.mxu0 0.0
    %61 = vmatpush1.xpose.msra.mxu0 0.0
    %62 = vmatprep.subr.mxu0 0.0
    %63 = vmatpush1.xpose.msra.mxu0 %v30
    %64 = vmatprep.subr.mxu0 0.0
    %65 = vmatpush2.xpose.msra.mxu0 0.0
    %66 = vmatprep.subr.mxu0 0.0
    %67 = vmatpush2.xpose.msra.mxu0 0.0
    %68 = vmatprep.subr.mxu0 0.0
    %69 = vmatpush2.xpose.msra.mxu0 0.0
    %70 = vmatprep.subr.mxu0 0.0
    %71 = vmatpush2.xpose.msra.mxu0 0.0
    %72 = vmatprep.subr.mxu0 0.0
    %73 = vmatpush2.xpose.msra.mxu0 0.0
    %74 = vmatprep.subr.mxu0 0.0
    %75 = vmatpush2.xpose.msra.mxu0 0.0
    %76 = vmatprep.subr.mxu0 0.0
    %77 = vmatpush2.xpose.msra.mxu0 0.0
    %78 = vmatprep.subr.mxu0 0.0
    %79 = vmatpush2.xpose.msra.mxu0 0.0
    %80 = vmatprep.subr.mxu0 0.0
    %81 = vmatpush2.xpose.msra.mxu0 0.0
    %82 = vmatprep.subr.mxu0 0.0
    %83 = vmatpush2.xpose.msra.mxu0 0.0
    %84 = vmatprep.subr.mxu0 0.0
    %85 = vmatpush2.xpose.msra.mxu0 0.0
    %86 = vmatprep.subr.mxu0 0.0
    %87 = vmatpush2.xpose.msra.mxu0 0.0
    %88 = vmatprep.subr.mxu0 0.0
    %89 = vmatpush2.xpose.msra.mxu0 0.0
    %90 = vmatprep.subr.mxu0 0.0
    %91 = vmatpush2.xpose.msra.mxu0 0.0
    %92 = vmatprep.subr.mxu0 0.0
    %93 = vmatpush2.xpose.msra.mxu0 0.0
    %94 = vmatprep.subr.mxu0 0.0
    %95 = vmatpush2.xpose.msra.mxu0 0.0
    %96 = vmatprep.mubr.f32.mxu0 0.0
    %97 = vmatmul.mubr.f32.gmra.mxu0 %v27
    %v98 = vpop.f32.mrf.mxu0
    %v99 = vadd.f32 0.0, %v98
    %v100 = vpop.f32.mrf.mxu0
    %101 = vdwg.mxu0
    %v103 = vsel %vm25, %v22, 0
    %v106 = vsel %vm25, %v24, 0
    %108 = vmatprep.subr.mxu0 0.0
    %109 = vmatpush1.xpose.msra.mxu0 0.0
    %110 = vmatprep.subr.mxu0 0.0
    %111 = vmatpush1.xpose.msra.mxu0 0.0
    %112 = vmatprep.subr.mxu0 0.0
    %113 = vmatpush1.xpose.msra.mxu0 0.0
    %114 = vmatprep.subr.mxu0 0.0
    %115 = vmatpush1.xpose.msra.mxu0 0.0
    %116 = vmatprep.subr.mxu0 0.0
    %117 = vmatpush1.xpose.msra.mxu0 0.0
    %118 = vmatprep.subr.mxu0 0.0
    %119 = vmatpush1.xpose.msra.mxu0 0.0
    %120 = vmatprep.subr.mxu0 0.0
    %121 = vmatpush1.xpose.msra.mxu0 0.0
    %122 = vmatprep.subr.mxu0 0.0
    %123 = vmatpush1.xpose.msra.mxu0 0.0
    %124 = vmatprep.subr.mxu0 0.0
    %125 = vmatpush1.xpose.msra.mxu0 0.0
    %126 = vmatprep.subr.mxu0 0.0
    %127 = vmatpush1.xpose.msra.mxu0 0.0
    %128 = vmatprep.subr.mxu0 0.0
    %129 = vmatpush1.xpose.msra.mxu0 0.0
    %130 = vmatprep.subr.mxu0 0.0
    %131 = vmatpush1.xpose.msra.mxu0 0.0
    %132 = vmatprep.subr.mxu0 0.0
    %133 = vmatpush1.xpose.msra.mxu0 0.0
    %134 = vmatprep.subr.mxu0 0.0
    %135 = vmatpush1.xpose.msra.mxu0 0.0
    %136 = vmatprep.subr.mxu0 0.0
    %137 = vmatpush1.xpose.msra.mxu0 0.0
    %138 = vmatprep.subr.mxu0 0.0
    %139 = vmatpush1.xpose.msra.mxu0 %v106
    %140 = vmatprep.subr.mxu0 0.0
    %141 = vmatpush2.xpose.msra.mxu0 0.0
    %142 = vmatprep.subr.mxu0 0.0
    %143 = vmatpush2.xpose.msra.mxu0 0.0
    %144 = vmatprep.subr.mxu0 0.0
    %145 = vmatpush2.xpose.msra.mxu0 0.0
    %146 = vmatprep.subr.mxu0 0.0
    %147 = vmatpush2.xpose.msra.mxu0 0.0
    %148 = vmatprep.subr.mxu0 0.0
    %149 = vmatpush2.xpose.msra.mxu0 0.0
    %150 = vmatprep.subr.mxu0 0.0
    %151 = vmatpush2.xpose.msra.mxu0 0.0
    %152 = vmatprep.subr.mxu0 0.0
    %153 = vmatpush2.xpose.msra.mxu0 0.0
    %154 = vmatprep.subr.mxu0 0.0
    %155 = vmatpush2.xpose.msra.mxu0 0.0
    %156 = vmatprep.subr.mxu0 0.0
    %157 = vmatpush2.xpose.msra.mxu0 0.0
    %158 = vmatprep.subr.mxu0 0.0
    %159 = vmatpush2.xpose.msra.mxu0 0.0
    %160 = vmatprep.subr.mxu0 0.0
    %161 = vmatpush2.xpose.msra.mxu0 0.0
    %162 = vmatprep.subr.mxu0 0.0
    %163 = vmatpush2.xpose.msra.mxu0 0.0
    %164 = vmatprep.subr.mxu0 0.0
    %165 = vmatpush2.xpose.msra.mxu0 0.0
    %166 = vmatprep.subr.mxu0 0.0
    %167 = vmatpush2.xpose.msra.mxu0 0.0
    %168 = vmatprep.subr.mxu0 0.0
    %169 = vmatpush2.xpose.msra.mxu0 0.0
    %170 = vmatprep.subr.mxu0 0.0
    %171 = vmatpush2.xpose.msra.mxu0 0.0
    %172 = vmatprep.mubr.f32.mxu0 0.0
    %173 = vmatmul.mubr.f32.gmra.mxu0 %v103
    %v174 = vpop.f32.mrf.mxu0
    %v175 = vadd.f32 0.0, %v174
    %v176 = vpop.f32.mrf.mxu0
    %177 = vdwg.mxu0
    %v178 = vlaneseq
    %v179 = vand.u32 %v178, 127
    %v180 = vld [vmem:[%s0] sm:$0x1]
    %v181 = vld [vmem:[%s0 + $0x1] sm:$0x1]
    %v182 = vlaneseq
    %v183 = vshrl.u32 %v182, 7
    %v184 = vsub.s32 0, %v183
    %v185 = vrot.slane %v180, %v184
    %v186 = vlaneseq
    %v187 = vshrl.u32 %v186, 7
    %v188 = vsub.s32 0, %v187
    %v189 = vrot.slane %v181, %v188
    %190 = vset.pattern.permute.xlu0 0
    %191 = vperm.xlu0 %190, %v185
    %v192 = vpop.permute.xlu0 %191
    %193 = vset.pattern.permute.xlu0 0
    %194 = vperm.xlu0 %193, %v189
    %v195 = vpop.permute.xlu0 %194
    %vm196 = vcmp.lt.s32.totalorder %v179, %v192
    %vm197 = vcmp.lt.s32.totalorder %v179, %v195
    %v198 = vsel %vm196, %v99, -1e+30
    %v199 = vsel %vm197, %v175, -1e+30
    %vm200 = vcmask 64512
    %v201 = vsel %vm200, %v198, -inf
    %202 = vmax.xlane.f32.xlu0 %v201
    %v203 = vpop.xlane.xlu0 %202
    %v204 = vsel %vm200, %v199, -inf
    %205 = vmax.xlane.f32.xlu0 %v204
    %v206 = vpop.xlane.xlu0 %205
    %v207 = vsub.f32 %v198, %v203
    %v208 = vsub.f32 %v199, %v206
    %v209 = vmul.f32 %v207, 1.442695
    %v210 = vpow.pop %v209
    %v211 = vmul.f32 %v208, 1.442695
    %v212 = vpow.pop %v211
    %v213 = vsel %vm200, %v210, 0.0
    %214 = vadd.xlane.f32.xlu0 %v213
    %v215 = vpop.xlane.xlu0 %214
    %v216 = vsel %vm200, %v212, 0.0
    %217 = vadd.xlane.f32.xlu0 %v216
    %v218 = vpop.xlane.xlu0 %217
    %v219 = vrcp.pop %v215
    %v220 = vmul.f32 %v210, %v219
    %v221 = vrcp.pop %v218
    %v222 = vmul.f32 %v212, %v221
    %v224 = vsel %vm200, %v220, 0
    %226 = vmatprep.subr.mxu0 0.0
    %227 = vmatpush1.msra.mxu0 0.0
    %228 = vmatprep.subr.mxu0 0.0
    %229 = vmatpush1.msra.mxu0 0.0
    %230 = vmatprep.subr.mxu0 0.0
    %231 = vmatpush1.msra.mxu0 0.0
    %232 = vmatprep.subr.mxu0 0.0
    %233 = vmatpush1.msra.mxu0 0.0
    %234 = vmatprep.subr.mxu0 0.0
    %235 = vmatpush1.msra.mxu0 0.0
    %236 = vmatprep.subr.mxu0 0.0
    %237 = vmatpush1.msra.mxu0 0.0
    %238 = vmatprep.subr.mxu0 0.0
    %239 = vmatpush1.msra.mxu0 0.0
    %240 = vmatprep.subr.mxu0 0.0
    %241 = vmatpush1.msra.mxu0 0.0
    %242 = vmatprep.subr.mxu0 0.0
    %243 = vmatpush1.msra.mxu0 0.0
    %244 = vmatprep.subr.mxu0 0.0
    %245 = vmatpush1.msra.mxu0 0.0
    %246 = vmatprep.subr.mxu0 0.0
    %247 = vmatpush1.msra.mxu0 0.0
    %248 = vmatprep.subr.mxu0 0.0
    %249 = vmatpush1.msra.mxu0 0.0
    %250 = vmatprep.subr.mxu0 0.0
    %251 = vmatpush1.msra.mxu0 0.0
    %252 = vmatprep.subr.mxu0 0.0
    %253 = vmatpush1.msra.mxu0 0.0
    %254 = vmatprep.subr.mxu0 0.0
    %255 = vmatpush1.msra.mxu0 0.0
    %256 = vmatprep.subr.mxu0 0.0
    %257 = vmatpush1.msra.mxu0 %v23
    %258 = vmatprep.subr.mxu0 0.0
    %259 = vmatpush2.msra.mxu0 0.0
    %260 = vmatprep.subr.mxu0 0.0
    %261 = vmatpush2.msra.mxu0 0.0
    %262 = vmatprep.subr.mxu0 0.0
    %263 = vmatpush2.msra.mxu0 0.0
    %264 = vmatprep.subr.mxu0 0.0
    %265 = vmatpush2.msra.mxu0 0.0
    %266 = vmatprep.subr.mxu0 0.0
    %267 = vmatpush2.msra.mxu0 0.0
    %268 = vmatprep.subr.mxu0 0.0
    %269 = vmatpush2.msra.mxu0 0.0
    %270 = vmatprep.subr.mxu0 0.0
    %271 = vmatpush2.msra.mxu0 0.0
    %272 = vmatprep.subr.mxu0 0.0
    %273 = vmatpush2.msra.mxu0 0.0
    %274 = vmatprep.subr.mxu0 0.0
    %275 = vmatpush2.msra.mxu0 0.0
    %276 = vmatprep.subr.mxu0 0.0
    %277 = vmatpush2.msra.mxu0 0.0
    %278 = vmatprep.subr.mxu0 0.0
    %279 = vmatpush2.msra.mxu0 0.0
    %280 = vmatprep.subr.mxu0 0.0
    %281 = vmatpush2.msra.mxu0 0.0
    %282 = vmatprep.subr.mxu0 0.0
    %283 = vmatpush2.msra.mxu0 0.0
    %284 = vmatprep.subr.mxu0 0.0
    %285 = vmatpush2.msra.mxu0 0.0
    %286 = vmatprep.subr.mxu0 0.0
    %287 = vmatpush2.msra.mxu0 0.0
    %288 = vmatprep.subr.mxu0 0.0
    %289 = vmatpush2.msra.mxu0 0.0
    %290 = vmatprep.mubr.f32.mxu0 0.0
    %291 = vmatmul.mubr.f32.gmra.mxu0 %v224
    %v292 = vpop.f32.mrf.mxu0
    %v293 = vadd.f32 0.0, %v292
    %v294 = vpop.f32.mrf.mxu0
    %295 = vdwg.mxu0
    %v297 = vsel %vm200, %v222, 0
    %299 = vmatprep.subr.mxu0 0.0
    %300 = vmatpush1.msra.mxu0 0.0
    %301 = vmatprep.subr.mxu0 0.0
    %302 = vmatpush1.msra.mxu0 0.0
    %303 = vmatprep.subr.mxu0 0.0
    %304 = vmatpush1.msra.mxu0 0.0
    %305 = vmatprep.subr.mxu0 0.0
    %306 = vmatpush1.msra.mxu0 0.0
    %307 = vmatprep.subr.mxu0 0.0
    %308 = vmatpush1.msra.mxu0 0.0
    %309 = vmatprep.subr.mxu0 0.0
    %310 = vmatpush1.msra.mxu0 0.0
    %311 = vmatprep.subr.mxu0 0.0
    %312 = vmatpush1.msra.mxu0 0.0
    %313 = vmatprep.subr.mxu0 0.0
    %314 = vmatpush1.msra.mxu0 0.0
    %315 = vmatprep.subr.mxu0 0.0
    %316 = vmatpush1.msra.mxu0 0.0
    %317 = vmatprep.subr.mxu0 0.0
    %318 = vmatpush1.msra.mxu0 0.0
    %319 = vmatprep.subr.mxu0 0.0
    %320 = vmatpush1.msra.mxu0 0.0
    %321 = vmatprep.subr.mxu0 0.0
    %322 = vmatpush1.msra.mxu0 0.0
    %323 = vmatprep.subr.mxu0 0.0
    %324 = vmatpush1.msra.mxu0 0.0
    %325 = vmatprep.subr.mxu0 0.0
    %326 = vmatpush1.msra.mxu0 0.0
    %327 = vmatprep.subr.mxu0 0.0
    %328 = vmatpush1.msra.mxu0 0.0
    %329 = vmatprep.subr.mxu0 0.0
    %330 = vmatpush1.msra.mxu0 %v24
    %331 = vmatprep.subr.mxu0 0.0
    %332 = vmatpush2.msra.mxu0 0.0
    %333 = vmatprep.subr.mxu0 0.0
    %334 = vmatpush2.msra.mxu0 0.0
    %335 = vmatprep.subr.mxu0 0.0
    %336 = vmatpush2.msra.mxu0 0.0
    %337 = vmatprep.subr.mxu0 0.0
    %338 = vmatpush2.msra.mxu0 0.0
    %339 = vmatprep.subr.mxu0 0.0
    %340 = vmatpush2.msra.mxu0 0.0
    %341 = vmatprep.subr.mxu0 0.0
    %342 = vmatpush2.msra.mxu0 0.0
    %343 = vmatprep.subr.mxu0 0.0
    %344 = vmatpush2.msra.mxu0 0.0
    %345 = vmatprep.subr.mxu0 0.0
    %346 = vmatpush2.msra.mxu0 0.0
    %347 = vmatprep.subr.mxu0 0.0
    %348 = vmatpush2.msra.mxu0 0.0
    %349 = vmatprep.subr.mxu0 0.0
    %350 = vmatpush2.msra.mxu0 0.0
    %351 = vmatprep.subr.mxu0 0.0
    %352 = vmatpush2.msra.mxu0 0.0
    %353 = vmatprep.subr.mxu0 0.0
    %354 = vmatpush2.msra.mxu0 0.0
    %355 = vmatprep.subr.mxu0 0.0
    %356 = vmatpush2.msra.mxu0 0.0
    %357 = vmatprep.subr.mxu0 0.0
    %358 = vmatpush2.msra.mxu0 0.0
    %359 = vmatprep.subr.mxu0 0.0
    %360 = vmatpush2.msra.mxu0 0.0
    %361 = vmatprep.subr.mxu0 0.0
    %362 = vmatpush2.msra.mxu0 0.0
    %363 = vmatprep.mubr.f32.mxu0 0.0
    %364 = vmatmul.mubr.f32.gmra.mxu0 %v297
    %v365 = vpop.f32.mrf.mxu0
    %v366 = vadd.f32 0.0, %v365
    %v367 = vpop.f32.mrf.mxu0
    %368 = vdwg.mxu0
    %v369 = vld [vmem:[%s3] sm:$0xff]
    %v370 = vld [vmem:[%s3 + $0x8] sm:$0xff]
    %v371 = vld [vmem:[%s3 + $0x10] sm:$0xff]
    %v372 = vld [vmem:[%s3 + $0x18] sm:$0xff]
    %v373 = vld [vmem:[%s3 + $0x20] sm:$0xff]
    %v374 = vld [vmem:[%s3 + $0x28] sm:$0xff]
    %v375 = vld [vmem:[%s3 + $0x30] sm:$0xff]
    %v376 = vld [vmem:[%s3 + $0x38] sm:$0xff]
    %377 = vmatprep.subr.mxu0 0.0
    %378 = vmatpush1.msra.mxu0 0.0
    %379 = vmatprep.subr.mxu0 0.0
    %380 = vmatpush1.msra.mxu0 0.0
    %381 = vmatprep.subr.mxu0 0.0
    %382 = vmatpush1.msra.mxu0 0.0
    %383 = vmatprep.subr.mxu0 0.0
    %384 = vmatpush1.msra.mxu0 0.0
    %385 = vmatprep.subr.mxu0 0.0
    %386 = vmatpush1.msra.mxu0 0.0
    %387 = vmatprep.subr.mxu0 0.0
    %388 = vmatpush1.msra.mxu0 0.0
    %389 = vmatprep.subr.mxu0 0.0
    %390 = vmatpush1.msra.mxu0 0.0
    %391 = vmatprep.subr.mxu0 0.0
    %392 = vmatpush1.msra.mxu0 0.0
    %393 = vmatprep.subr.mxu0 0.0
    %394 = vmatpush1.msra.mxu0 0.0
    %395 = vmatprep.subr.mxu0 0.0
    %396 = vmatpush1.msra.mxu0 0.0
    %397 = vmatprep.subr.mxu0 0.0
    %398 = vmatpush1.msra.mxu0 0.0
    %399 = vmatprep.subr.mxu0 0.0
    %400 = vmatpush1.msra.mxu0 0.0
    %401 = vmatprep.subr.mxu0 0.0
    %402 = vmatpush1.msra.mxu0 %v376
    %403 = vmatprep.subr.mxu0 0.0
    %404 = vmatpush1.msra.mxu0 %v375
    %405 = vmatprep.subr.mxu0 0.0
    %406 = vmatpush1.msra.mxu0 %v374
    %407 = vmatprep.subr.mxu0 0.0
    %408 = vmatpush1.msra.mxu0 %v373
    %409 = vmatprep.subr.mxu0 0.0
    %410 = vmatpush2.msra.mxu0 0.0
    %411 = vmatprep.subr.mxu0 0.0
    %412 = vmatpush2.msra.mxu0 0.0
    %413 = vmatprep.subr.mxu0 0.0
    %414 = vmatpush2.msra.mxu0 0.0
    %415 = vmatprep.subr.mxu0 0.0
    %416 = vmatpush2.msra.mxu0 0.0
    %417 = vmatprep.subr.mxu0 0.0
    %418 = vmatpush2.msra.mxu0 0.0
    %419 = vmatprep.subr.mxu0 0.0
    %420 = vmatpush2.msra.mxu0 0.0
    %421 = vmatprep.subr.mxu0 0.0
    %422 = vmatpush2.msra.mxu0 0.0
    %423 = vmatprep.subr.mxu0 0.0
    %424 = vmatpush2.msra.mxu0 0.0
    %425 = vmatprep.subr.mxu0 0.0
    %426 = vmatpush2.msra.mxu0 0.0
    %427 = vmatprep.subr.mxu0 0.0
    %428 = vmatpush2.msra.mxu0 0.0
    %429 = vmatprep.subr.mxu0 0.0
    %430 = vmatpush2.msra.mxu0 0.0
    %431 = vmatprep.subr.mxu0 0.0
    %432 = vmatpush2.msra.mxu0 0.0
    %433 = vmatprep.subr.mxu0 0.0
    %434 = vmatpush2.msra.mxu0 0.0
    %435 = vmatprep.subr.mxu0 0.0
    %436 = vmatpush2.msra.mxu0 0.0
    %437 = vmatprep.subr.mxu0 0.0
    %438 = vmatpush2.msra.mxu0 0.0
    %439 = vmatprep.subr.mxu0 0.0
    %440 = vmatpush2.msra.mxu0 0.0
    %441 = vmatprep.mubr.f32.mxu0 0.0
    %442 = vmatmul.mubr.f32.gmra.mxu0 %v27
    %v443 = vpop.f32.mrf.mxu0
    %v444 = vadd.f32 0.0, %v443
    %v445 = vpop.f32.mrf.mxu0
    %446 = vmatprep.mubr.f32.mxu0 0.0
    %447 = vmatmul.mubr.f32.gmra.mxu0 %v103
    %v448 = vpop.f32.mrf.mxu0
    %v449 = vadd.f32 0.0, %v448
    %v450 = vpop.f32.mrf.mxu0
    %451 = vdwg.mxu0
    %v453 = vsel %vm25, %v293, 0
    %v456 = vsel %vm25, %v366, 0
    %458 = vmatprep.subr.mxu0 0.0
    %459 = vmatpush1.msra.mxu0 0.0
    %460 = vmatprep.subr.mxu0 0.0
    %461 = vmatpush1.msra.mxu0 0.0
    %462 = vmatprep.subr.mxu0 0.0
    %463 = vmatpush1.msra.mxu0 0.0
    %464 = vmatprep.subr.mxu0 0.0
    %465 = vmatpush1.msra.mxu0 0.0
    %466 = vmatprep.subr.mxu0 0.0
    %467 = vmatpush1.msra.mxu0 0.0
    %468 = vmatprep.subr.mxu0 0.0
    %469 = vmatpush1.msra.mxu0 0.0
    %470 = vmatprep.subr.mxu0 0.0
    %471 = vmatpush1.msra.mxu0 0.0
    %472 = vmatprep.subr.mxu0 0.0
    %473 = vmatpush1.msra.mxu0 0.0
    %474 = vmatprep.subr.mxu0 0.0
    %475 = vmatpush1.msra.mxu0 0.0
    %476 = vmatprep.subr.mxu0 0.0
    %477 = vmatpush1.msra.mxu0 0.0
    %478 = vmatprep.subr.mxu0 0.0
    %479 = vmatpush1.msra.mxu0 0.0
    %480 = vmatprep.subr.mxu0 0.0
    %481 = vmatpush1.msra.mxu0 0.0
    %482 = vmatprep.subr.mxu0 0.0
    %483 = vmatpush1.msra.mxu0 %v372
    %484 = vmatprep.subr.mxu0 0.0
    %485 = vmatpush1.msra.mxu0 %v371
    %486 = vmatprep.subr.mxu0 0.0
    %487 = vmatpush1.msra.mxu0 %v370
    %488 = vmatprep.subr.mxu0 0.0
    %489 = vmatpush1.msra.mxu0 %v369
    %490 = vmatprep.subr.mxu0 0.0
    %491 = vmatpush2.msra.mxu0 0.0
    %492 = vmatprep.subr.mxu0 0.0
    %493 = vmatpush2.msra.mxu0 0.0
    %494 = vmatprep.subr.mxu0 0.0
    %495 = vmatpush2.msra.mxu0 0.0
    %496 = vmatprep.subr.mxu0 0.0
    %497 = vmatpush2.msra.mxu0 0.0
    %498 = vmatprep.subr.mxu0 0.0
    %499 = vmatpush2.msra.mxu0 0.0
    %500 = vmatprep.subr.mxu0 0.0
    %501 = vmatpush2.msra.mxu0 0.0
    %502 = vmatprep.subr.mxu0 0.0
    %503 = vmatpush2.msra.mxu0 0.0
    %504 = vmatprep.subr.mxu0 0.0
    %505 = vmatpush2.msra.mxu0 0.0
    %506 = vmatprep.subr.mxu0 0.0
    %507 = vmatpush2.msra.mxu0 0.0
    %508 = vmatprep.subr.mxu0 0.0
    %509 = vmatpush2.msra.mxu0 0.0
    %510 = vmatprep.subr.mxu0 0.0
    %511 = vmatpush2.msra.mxu0 0.0
    %512 = vmatprep.subr.mxu0 0.0
    %513 = vmatpush2.msra.mxu0 0.0
    %514 = vmatprep.subr.mxu0 0.0
    %515 = vmatpush2.msra.mxu0 0.0
    %516 = vmatprep.subr.mxu0 0.0
    %517 = vmatpush2.msra.mxu0 0.0
    %518 = vmatprep.subr.mxu0 0.0
    %519 = vmatpush2.msra.mxu0 0.0
    %520 = vmatprep.subr.mxu0 0.0
    %521 = vmatpush2.msra.mxu0 0.0
    %522 = vmatprep.mubr.f32.mxu0 0.0
    %523 = vmatmul.mubr.f32.gmra.mxu0 %v453
    %v524 = vpop.f32.mrf.mxu0
    %v525 = vadd.f32 %v444, %v524
    %v526 = vpop.f32.mrf.mxu0
    %527 = vmatprep.mubr.f32.mxu0 0.0
    %528 = vmatmul.mubr.f32.gmra.mxu0 %v456
    %v529 = vpop.f32.mrf.mxu0
    %v530 = vadd.f32 %v449, %v529
    %v531 = vpop.f32.mrf.mxu0
    %532 = vdwg.mxu0
    %v533 = vtanh.pop %v525
    %v534 = vtanh.pop %v530
    %v535 = vcombine.high %v533, 0.0
    %v537 = vunpack.c.l.s4 1983009808
    %v538 = vunpack.c.0.s8 %v537
    %v539 = vlaneseq
    %v540 = vshrl.u32 %v539, 7
    %v541 = vsub.s32 %v538, %v540
    %v542 = vrot.slane %v533, %v541
    %v544 = vunpack.c.l.s4 1983009808
    %v545 = vunpack.c.0.s8 %v544
    %v546 = vlaneseq
    %v547 = vshrl.u32 %v546, 7
    %v548 = vsub.s32 %v545, %v547
    %v549 = vrot.slane %v535, %v548
    %v550 = vcombine.high %v534, 0.0
    %v552 = vunpack.c.l.s4 1983009808
    %v553 = vunpack.c.0.s8 %v552
    %v554 = vlaneseq
    %v555 = vshrl.u32 %v554, 7
    %v556 = vsub.s32 %v553, %v555
    %v557 = vrot.slane %v534, %v556
    %v559 = vunpack.c.l.s4 1983009808
    %v560 = vunpack.c.0.s8 %v559
    %v561 = vlaneseq
    %v562 = vshrl.u32 %v561, 7
    %v563 = vsub.s32 %v560, %v562
    %v564 = vrot.slane %v550, %v563
    %v565 = vcombine.low %v542, %v557
    %v566 = vcombine.high %v542, %v557
    %v568 = vunpack.c.l.s4 1934713408
    %v569 = vunpack.c.0.s8 %v568
    %v570 = vlaneseq
    %v571 = vshrl.u32 %v570, 7
    %v572 = vsub.s32 %v569, %v571
    %v573 = vrot.slane %v565, %v572
    %v575 = vunpack.c.l.s4 1934713408
    %v576 = vunpack.c.0.s8 %v575
    %v577 = vlaneseq
    %v578 = vshrl.u32 %v577, 7
    %v579 = vsub.s32 %v576, %v578
    %v580 = vrot.slane %v566, %v579
    %v581 = vcombine.low %v549, %v564
    %v582 = vcombine.high %v549, %v564
    %v584 = vunpack.c.l.s4 1934713408
    %v585 = vunpack.c.0.s8 %v584
    %v586 = vlaneseq
    %v587 = vshrl.u32 %v586, 7
    %v588 = vsub.s32 %v585, %v587
    %v589 = vrot.slane %v581, %v588
    %v591 = vunpack.c.l.s4 1934713408
    %v592 = vunpack.c.0.s8 %v591
    %v593 = vlaneseq
    %v594 = vshrl.u32 %v593, 7
    %v595 = vsub.s32 %v592, %v594
    %v596 = vrot.slane %v582, %v595
    %v597 = vcombine.high %v573, 0.0
    %v598 = vcombine.high %v580, 0.0
    %v599 = vcombine.high %v589, 0.0
    %v600 = vcombine.high %v596, 0.0
    %vm601 = vcmask 254976
    %602 = vst.msk [vmem:[#allocation2] sm:$0x3] %vm601, %v573
    %603 = vst.msk [vmem:[#allocation2 + $0x2] sm:$0x3] %vm601, %v597
    %604 = vst.msk [vmem:[#allocation2 + $0x4] sm:$0x3] %vm601, %v580
    %605 = vst.msk [vmem:[#allocation2 + $0x6] sm:$0x3] %vm601, %v598
    %606 = vst.msk [vmem:[#allocation2 + $0x8] sm:$0x3] %vm601, %v589
    %607 = vst.msk [vmem:[#allocation2 + $0xa] sm:$0x3] %vm601, %v599
    %608 = vst.msk [vmem:[#allocation2 + $0xc] sm:$0x3] %vm601, %v596
    %609 = vst.msk [vmem:[#allocation2 + $0xe] sm:$0x3] %vm601, %v600
    %v610 = vcombine.high %v220, 0.0
    %v612 = vunpack.c.l.s4 1983009808
    %v613 = vunpack.c.0.s8 %v612
    %v614 = vlaneseq
    %v615 = vshrl.u32 %v614, 7
    %v616 = vsub.s32 %v613, %v615
    %v617 = vrot.slane %v220, %v616
    %v619 = vunpack.c.l.s4 1983009808
    %v620 = vunpack.c.0.s8 %v619
    %v621 = vlaneseq
    %v622 = vshrl.u32 %v621, 7
    %v623 = vsub.s32 %v620, %v622
    %v624 = vrot.slane %v610, %v623
    %v625 = vcombine.high %v222, 0.0
    %v627 = vunpack.c.l.s4 1983009808
    %v628 = vunpack.c.0.s8 %v627
    %v629 = vlaneseq
    %v630 = vshrl.u32 %v629, 7
    %v631 = vsub.s32 %v628, %v630
    %v632 = vrot.slane %v222, %v631
    %v634 = vunpack.c.l.s4 1983009808
    %v635 = vunpack.c.0.s8 %v634
    %v636 = vlaneseq
    %v637 = vshrl.u32 %v636, 7
    %v638 = vsub.s32 %v635, %v637
    %v639 = vrot.slane %v625, %v638
    %v640 = vcombine.low %v617, %v632
    %v641 = vcombine.high %v617, %v632
    %v643 = vunpack.c.l.s4 1934713408
    %v644 = vunpack.c.0.s8 %v643
    %v645 = vlaneseq
    %v646 = vshrl.u32 %v645, 7
    %v647 = vsub.s32 %v644, %v646
    %v648 = vrot.slane %v640, %v647
    %v650 = vunpack.c.l.s4 1934713408
    %v651 = vunpack.c.0.s8 %v650
    %v652 = vlaneseq
    %v653 = vshrl.u32 %v652, 7
    %v654 = vsub.s32 %v651, %v653
    %v655 = vrot.slane %v641, %v654
    %v656 = vcombine.low %v624, %v639
    %v657 = vcombine.high %v624, %v639
    %v659 = vunpack.c.l.s4 1934713408
    %v660 = vunpack.c.0.s8 %v659
    %v661 = vlaneseq
    %v662 = vshrl.u32 %v661, 7
    %v663 = vsub.s32 %v660, %v662
    %v664 = vrot.slane %v656, %v663
    %v666 = vunpack.c.l.s4 1934713408
    %v667 = vunpack.c.0.s8 %v666
    %v668 = vlaneseq
    %v669 = vshrl.u32 %v668, 7
    %v670 = vsub.s32 %v667, %v669
    %v671 = vrot.slane %v657, %v670
    %v672 = vcombine.high %v648, 0.0
    %v673 = vcombine.high %v655, 0.0
    %v674 = vcombine.high %v664, 0.0
    %v675 = vcombine.high %v671, 0.0
    %vm676 = vcmask 58368
    %677 = vst.msk [vmem:[#allocation4] sm:$0x3] %vm676, %v648
    %678 = vst.msk [vmem:[#allocation4 + $0x2] sm:$0x3] %vm676, %v672
    %679 = vst.msk [vmem:[#allocation4 + $0x4] sm:$0x3] %vm676, %v655
    %680 = vst.msk [vmem:[#allocation4 + $0x6] sm:$0x3] %vm676, %v673
    %681 = vst.msk [vmem:[#allocation4 + $0x8] sm:$0x3] %vm676, %v664
    %682 = vst.msk [vmem:[#allocation4 + $0xa] sm:$0x3] %vm676, %v674
    %683 = vst.msk [vmem:[#allocation4 + $0xc] sm:$0x3] %vm676, %v671
    %684 = vst.msk [vmem:[#allocation4 + $0xe] sm:$0x3] %vm676, %v675
    // Predicated region
    $region18: #{tpu_custom_call.1} parent=1 // pred_check
      _
    $region19: #{tpu_custom_call.1} parent=1 // pred_check_branch
      %686 = sbr.rel (0) target = $region21
    $region20: #{tpu_custom_call.1} parent=1 // pred_region
      %s688 = ssub.s32 256, 256
      %689 = vsyncadd [#allocation3], %s688
      %s690 = sshll.u32 [#allocation2], 4
      %s691 = int_to_ptr.vmem [resolvable:$true] %s690
      %696 = dma.vmem_to_hbm [thread:$0]  %s691, 256, %s4, [#allocation3], 32, 32, 2
    $region21: #{tpu_custom_call.1} parent=1 // pred_fallthru
      _
    // Predicated region
    $region22: #{tpu_custom_call.1} parent=1 // pred_check
      _
    $region23: #{tpu_custom_call.1} parent=1 // pred_check_branch
      %698 = sbr.rel (0) target = $region25
    $region24: #{tpu_custom_call.1} parent=1 // pred_region
      %s700 = ssub.s32 256, 256
      %701 = vsyncadd [#allocation5], %s700
      %s702 = sshll.u32 [#allocation4], 4
      %s703 = int_to_ptr.vmem [resolvable:$true] %s702
      %708 = dma.vmem_to_hbm [thread:$0]  %s703, 256, %s5, [#allocation5], 32, 32, 2
    $region25: #{tpu_custom_call.1} parent=1 // pred_fallthru
      _
    // Predicated region
    $region26: #{tpu_custom_call.1} parent=1 // pred_check
      _
    $region27: #{tpu_custom_call.1} parent=1 // pred_check_branch
      %710 = sbr.rel (0) target = $region29
    $region28: #{tpu_custom_call.1} parent=1 // pred_region
      %711 = dma.done [#allocation3], 256
    $region29: #{tpu_custom_call.1} parent=1 // pred_fallthru
      _
    // Predicated region
    $region30: #{tpu_custom_call.1} parent=1 // pred_check
      _
    $region31: #{tpu_custom_call.1} parent=1 // pred_check_branch
      %713 = sbr.rel (0) target = $region33
    $region32: #{tpu_custom_call.1} parent=1 // pred_region
      %714 = dma.done [#allocation5], 256
    $region33: #{tpu_custom_call.1} parent=1 // pred_fallthru
      _
    %715 = vsyncpa [#allocation3], 1
    %716 = vsyncpa [#allocation5], 1

</llo_original>
